<compile_context>
chip_gen: v7x
topology: tpu7x:2x2x1
jax: 0.10.0
libtpu: 0.0.40
codegen_flags: <defaults>
</compile_context>

<pallas_src>
import functools

import jax
import jax.numpy as jnp
import numpy as np
from jax.experimental import pallas as pl
from jax.experimental.pallas import tpu as pltpu

LANES = 128
SUBLANES = 8
MAX_ROW_TILE = 1024  # (1024, 128) f32 tile = 512 KiB per input stream per buffer


def _bce_logits_kernel(x_ref, y_ref, out_ref, *, n_valid, pos_weight, row_tile,
                       mask_tail):
    i = pl.program_id(0)

    x = x_ref[...].astype(jnp.float32)
    y = y_ref[...].astype(jnp.float32)

    # Stable BCE-with-logits:
    #   loss = pos_weight * y * softplus(-x) + (1 - y) * softplus(x)
    #   softplus(t) = max(t, 0) + log1p(exp(-|t|))
    # One exp + one log1p per element, shared between both branches.
    log_term = jnp.log1p(jnp.exp(-jnp.abs(x)))
    sp_pos = jnp.maximum(x, 0.0) + log_term    # softplus(x)  = -log(1 - sigmoid(x))
    sp_neg = jnp.maximum(-x, 0.0) + log_term   # softplus(-x) = -log(sigmoid(x))

    pw = jnp.float32(pos_weight)
    loss = pw * y * sp_neg + (1.0 - y) * sp_pos

    if mask_tail:
        # In-kernel validity mask for the padded tail (no mask stream from HBM).
        # NOTE: int32 flat index limits n to < 2^31 elements.
        row = jax.lax.broadcasted_iota(jnp.int32, (row_tile, LANES), 0)
        lane = jax.lax.broadcasted_iota(jnp.int32, (row_tile, LANES), 1)
        flat_idx = (i * row_tile + row) * LANES + lane
        loss = jnp.where(flat_idx < n_valid, loss, 0.0)

    # VALU-only in-tile reduction: (row_tile, 128) -> (8, 128) partial sums.
    # The reshape splits along sublane-tile boundaries, so it is a layout no-op.
    out_ref[...] = loss.reshape(row_tile // SUBLANES, SUBLANES, LANES).sum(axis=0)


def bce_with_logits_loss(prediction, targets, pos_weight=1.0, reduction='mean'):
    """BCEWithLogitsLoss forward (matches the PyTorch BCELoss module)."""
    assert prediction.shape == targets.shape
    n = int(np.prod(prediction.shape))

    rows = pl.cdiv(n, LANES)
    rows_aligned = pl.cdiv(rows, SUBLANES) * SUBLANES
    row_tile = min(MAX_ROW_TILE, rows_aligned)            # multiple of 8
    rows_pad = pl.cdiv(rows_aligned, row_tile) * row_tile
    total = rows_pad * LANES
    num_blocks = rows_pad // row_tile
    needs_pad = total != n                                  # static fast path

    def to_slab(a):
        flat = jnp.ravel(a)                                 # keep native dtype
        if needs_pad:
            flat = jnp.pad(flat, (0, total - n))            # only when required
        return flat.reshape(rows_pad, LANES)

    x2d = to_slab(prediction)
    y2d = to_slab(targets)

    kernel = functools.partial(
        _bce_logits_kernel,
        n_valid=n,
        pos_weight=float(pos_weight),
        row_tile=row_tile,
        mask_tail=needs_pad,
    )

    in_bytes = total * (prediction.dtype.itemsize + targets.dtype.itemsize)
    out_bytes = num_blocks * SUBLANES * LANES * 4
    cost = pl.CostEstimate(
        flops=10 * total,
        transcendentals=2 * total,
        bytes_accessed=in_bytes + out_bytes,
    )

    partials = pl.pallas_call(
        kernel,
        out_shape=jax.ShapeDtypeStruct((num_blocks * SUBLANES, LANES), jnp.float32),
        grid_spec=pltpu.PrefetchScalarGridSpec(
            num_scalar_prefetch=0,
            grid=(num_blocks,),
            in_specs=[
                pl.BlockSpec((row_tile, LANES), lambda i: (i, 0)),
                pl.BlockSpec((row_tile, LANES), lambda i: (i, 0)),
            ],
            out_specs=pl.BlockSpec((SUBLANES, LANES), lambda i: (i, 0)),
        ),
        compiler_params=pltpu.CompilerParams(
            dimension_semantics=("parallel",)),
        cost_estimate=cost,
    )(x2d, y2d)

    total_sum = jnp.sum(partials)

    if reduction == 'mean':
        return total_sum / jnp.float32(n)
    elif reduction == 'sum':
        return total_sum
    else:
        # TODO(synk): reduction='none' (elementwise output) not implemented.
        raise NotImplementedError("reduction must be 'mean' or 'sum'")


def _reference(prediction, targets, pos_weight=1.0):
    """Pure-JAX BCEWithLogitsLoss (mean) reference, matching PyTorch."""
    x = prediction.astype(jnp.float32)
    y = targets.astype(jnp.float32)
    log_sig = jax.nn.log_sigmoid(x)         # log(sigmoid(x))
    log_one_m_sig = jax.nn.log_sigmoid(-x)  # log(1 - sigmoid(x))
    loss = -(pos_weight * y * log_sig + (1.0 - y) * log_one_m_sig)
    return jnp.mean(loss)


if __name__ == "__main__":
    key = jax.random.PRNGKey(0)
    k1, k2 = jax.random.split(key)

    # NCHW logits / binary targets, consistent with the module's usage.
    B, C, H, W = 2, 4, 16, 16
    prediction = jax.random.normal(k1, (B, C, H, W), dtype=jnp.float32)
    targets = (jax.random.uniform(k2, (B, C, H, W)) > 0.5).astype(jnp.float32)

    # Default module config: reduction='mean', pos_weight=1.0
    out = bce_with_logits_loss(prediction, targets, pos_weight=1.0)
    out = jax.block_until_ready(out)
    ref = _reference(prediction, targets, pos_weight=1.0)
    assert jnp.allclose(out, ref, rtol=1e-5, atol=1e-6), (out, ref)

    # Non-trivial pos_weight.
    out_pw = bce_with_logits_loss(prediction, targets, pos_weight=2.5)
    out_pw = jax.block_until_ready(out_pw)
    ref_pw = _reference(prediction, targets, pos_weight=2.5)
    assert jnp.allclose(out_pw, ref_pw, rtol=1e-5, atol=1e-6), (out_pw, ref_pw)

    # A non-slab-aligned size exercising the padded/masked tail path.
    n_odd = 1000
    x_odd = jax.random.normal(k1, (n_odd,), dtype=jnp.float32)
    y_odd = (jax.random.uniform(k2, (n_odd,)) > 0.5).astype(jnp.float32)
    out_odd = jax.block_until_ready(
        bce_with_logits_loss(x_odd, y_odd, pos_weight=1.7))
    ref_odd = _reference(x_odd, y_odd, pos_weight=1.7)
    assert jnp.allclose(out_odd, ref_odd, rtol=1e-5, atol=1e-6), (out_odd, ref_odd)

    print("KERNEL_OK")
</pallas_src>

<mosaic_0001>
module attributes {stable_mosaic.version = 11 : i64} {
  func.func @_bce_logits_kernel(%arg0: i32, %arg1: memref<16x128xf32, #tpu.memory_space<vmem>>, %arg2: memref<16x128xf32, #tpu.memory_space<vmem>>, %arg3: memref<8x128xf32, #tpu.memory_space<vmem>>) attributes {dimension_semantics = [#tpu.dimension_semantics<parallel>], iteration_bounds = array<i64: 1>, scalar_prefetch = 0 : i64, scratch_operands = 0 : i64, tpu.core_type = #tpu.core_type<tc>, window_params = [{transform_indices = @transform_0, window_bounds = array<i64: 16, 128>}, {transform_indices = @transform_1, window_bounds = array<i64: 16, 128>}, {transform_indices = @transform_2, window_bounds = array<i64: 8, 128>}]} {
    %c0 = arith.constant 0 : index
    %c0_0 = arith.constant 0 : index
    %0 = vector.load %arg1[%c0, %c0_0] : memref<16x128xf32, #tpu.memory_space<vmem>>, vector<16x128xf32>
    %c0_1 = arith.constant 0 : index
    %c0_2 = arith.constant 0 : index
    %1 = vector.load %arg2[%c0_1, %c0_2] : memref<16x128xf32, #tpu.memory_space<vmem>>, vector<16x128xf32>
    %2 = math.absf %0 : vector<16x128xf32>
    %cst = arith.constant 0.000000e+00 : f32
    %3 = vector.broadcast %cst : f32 to vector<16x128xf32>
    %4 = arith.subf %3, %2 : vector<16x128xf32>
    %5 = math.exp %4 : vector<16x128xf32>
    %6 = math.log1p %5 : vector<16x128xf32>
    %cst_3 = arith.constant 0.000000e+00 : f32
    %7 = vector.broadcast %cst_3 : f32 to vector<16x128xf32>
    %8 = arith.maximumf %0, %7 : vector<16x128xf32>
    %9 = arith.addf %8, %6 : vector<16x128xf32>
    %cst_4 = arith.constant 0.000000e+00 : f32
    %10 = vector.broadcast %cst_4 : f32 to vector<16x128xf32>
    %11 = arith.subf %10, %0 : vector<16x128xf32>
    %cst_5 = arith.constant 0.000000e+00 : f32
    %12 = vector.broadcast %cst_5 : f32 to vector<16x128xf32>
    %13 = arith.maximumf %11, %12 : vector<16x128xf32>
    %14 = arith.addf %13, %6 : vector<16x128xf32>
    %cst_6 = arith.constant 1.000000e+00 : f32
    %15 = vector.broadcast %cst_6 : f32 to vector<16x128xf32>
    %16 = arith.mulf %15, %1 : vector<16x128xf32>
    %17 = arith.mulf %16, %14 : vector<16x128xf32>
    %cst_7 = arith.constant 1.000000e+00 : f32
    %18 = vector.broadcast %cst_7 : f32 to vector<16x128xf32>
    %19 = arith.subf %18, %1 : vector<16x128xf32>
    %20 = arith.mulf %19, %9 : vector<16x128xf32>
    %21 = arith.addf %17, %20 : vector<16x128xf32>
    %22 = vector.shape_cast %21 : vector<16x128xf32> to vector<2x8x128xf32>
    %cst_8 = arith.constant dense<0.000000e+00> : vector<8x128xf32>
    %23 = vector.multi_reduction <add>, %22, %cst_8 [0] : vector<2x8x128xf32> to vector<8x128xf32>
    %c0_9 = arith.constant 0 : index
    %c0_10 = arith.constant 0 : index
    %24 = vector.load %arg3[%c0_9, %c0_10] : memref<8x128xf32, #tpu.memory_space<vmem>>, vector<8x128xf32>
    tpu.vector_store %arg3[%c0_9, %c0_10], %23 {strides = array<i32>} : memref<8x128xf32, #tpu.memory_space<vmem>>, vector<8x128xf32>,
    return
  }
  func.func @transform_0(%arg0: i32) -> (i32, i32) {
    %c0_i32 = arith.constant 0 : i32
    %c0_i32_0 = arith.constant 0 : i32
    return %arg0, %c0_i32 : i32, i32
  }
  func.func @transform_1(%arg0: i32) -> (i32, i32) {
    %c0_i32 = arith.constant 0 : i32
    %c0_i32_0 = arith.constant 0 : i32
    return %arg0, %c0_i32 : i32, i32
  }
  func.func @transform_2(%arg0: i32) -> (i32, i32) {
    %c0_i32 = arith.constant 0 : i32
    %c0_i32_0 = arith.constant 0 : i32
    return %arg0, %c0_i32 : i32, i32
  }
}

</mosaic_0001>

<llo_original>
// kernel: tpu_custom_call.1
$region0: #{tpu_custom_call.1}
  #allocation0 [shape = 'u32[]', space=smem, size = 0x4, offset = 0x4, fixed_abs, tag = 'smem constant byte address 0x4 - core index']
  #allocation1 [shape = 'u32[144,128]{1,0:T(1,128)}', space=vmem, size = 0x12000, scoped, tag = 'internal scratch']
  %s0 = inlined_call_operand.hbm [shape: f32[16,128], index: 0, kind: input, shape index: {}]
  %s1 = inlined_call_operand.hbm [shape: f32[16,128], index: 1, kind: input, shape index: {}]
  %s2 = inlined_call_operand.hbm [shape: f32[8,128], index: 2, kind: output, shape index: {}]
  %s3 = sld [smem:[#allocation0]]
  $region26: #{tpu_custom_call.1} parent=0
    _
  %s5 = ssub.s32 1, %s3
  %s6 = scalar_select 0, %s5, %s3
  $region1: #{tpu_custom_call.1} parent=0
    #allocation2 [shape = 'u8[8192]{0}', space=vmem, size = 0x2000, scoped, tag = 'input window, operand 0, single buffered']
    #allocation3 [shape = 's32[1]{0}', space=sflag, size = 0x4, scoped, tag = 'scoped memory for tpu_custom_call.1']
    #allocation4 [shape = 's32[1]{0}', space=sflag, size = 0x4, scoped, tag = 'scoped memory for tpu_custom_call.1']
    #allocation5 [shape = 'u8[8192]{0}', space=vmem, size = 0x2000, scoped, tag = 'input window, operand 1, single buffered']
    #allocation6 [shape = 's32[1]{0}', space=sflag, size = 0x4, scoped, tag = 'scoped memory for tpu_custom_call.1']
    #allocation7 [shape = 'u8[4096]{0}', space=vmem, size = 0x1000, scoped, tag = 'output window, operand 0, single buffered']
    %7 = vsyncpa [#allocation3], 0
    %8 = vsyncpa [#allocation6], 0
    %9 = vsyncpa [#allocation4], 0
    // Predicated region
    $region2: #{tpu_custom_call.1} parent=1 // pred_check
      _
    $region3: #{tpu_custom_call.1} parent=1 // pred_check_branch
      %11 = sbr.rel (0) target = $region5
    $region4: #{tpu_custom_call.1} parent=1 // pred_region
      %s13 = ssub.s32 256, 256
      %14 = vsyncadd [#allocation3], %s13
      %s15 = sshll.u32 [#allocation2], 4
      %s16 = int_to_ptr.vmem [resolvable:$true] %s15
      %21 = dma.hbm_to_vmem [thread:$0]  %s0, 256, %s16, [#allocation3], 128, 128, 8
    $region5: #{tpu_custom_call.1} parent=1 // pred_fallthru
      _
    // Predicated region
    $region6: #{tpu_custom_call.1} parent=1 // pred_check
      _
    $region7: #{tpu_custom_call.1} parent=1 // pred_check_branch
      %23 = sbr.rel (0) target = $region9
    $region8: #{tpu_custom_call.1} parent=1 // pred_region
      %s25 = ssub.s32 256, 256
      %26 = vsyncadd [#allocation6], %s25
      %s27 = sshll.u32 [#allocation5], 4
      %s28 = int_to_ptr.vmem [resolvable:$true] %s27
      %33 = dma.hbm_to_vmem [thread:$0]  %s1, 256, %s28, [#allocation6], 128, 128, 8
    $region9: #{tpu_custom_call.1} parent=1 // pred_fallthru
      _
    // Predicated region
    $region10: #{tpu_custom_call.1} parent=1 // pred_check
      _
    $region11: #{tpu_custom_call.1} parent=1 // pred_check_branch
      %35 = sbr.rel (0) target = $region13
    $region12: #{tpu_custom_call.1} parent=1 // pred_region
      %36 = dma.done [#allocation3], 256
    $region13: #{tpu_custom_call.1} parent=1 // pred_fallthru
      _
    // Predicated region
    $region14: #{tpu_custom_call.1} parent=1 // pred_check
      _
    $region15: #{tpu_custom_call.1} parent=1 // pred_check_branch
      %38 = sbr.rel (0) target = $region17
    $region16: #{tpu_custom_call.1} parent=1 // pred_region
      %39 = dma.done [#allocation6], 256
    $region17: #{tpu_custom_call.1} parent=1 // pred_fallthru
      _
    %v40 = vld [vmem:[#allocation2] sm:$0xff]
    %v41 = vld [vmem:[#allocation2 + $0x8] sm:$0xff]
    %v42 = vld [vmem:[#allocation5] sm:$0xff]
    %v43 = vld [vmem:[#allocation5 + $0x8] sm:$0xff]
    %v44 = vand.u32 2147483647, %v40
    %v45 = vand.u32 2147483647, %v41
    %v46 = vsub.f32 0.0, %v44
    %v47 = vsub.f32 0.0, %v45
    %v48 = vmul.f32 %v46, 1.442695
    %v49 = vpow.pop %v48
    %v50 = vmul.f32 %v47, 1.442695
    %v51 = vpow.pop %v50
    %v52 = vadd.f32 %v49, 1.0
    %v53 = vlog2.pop %v52
    %v54 = vmul.f32 %v53, 0.6931472
    %v55 = vmul.f32 -0.5, %v49
    %v56 = vadd.f32 %v55, 1.0
    %v57 = vmul.f32 %v56, %v49
    %v58 = vand.u32 2147483647, %v49
    %vm59 = vcmp.lt.f32.partialorder %v58, 0.0004427343
    %v60 = vsel %vm59, %v57, %v54
    %v61 = vadd.f32 %v51, 1.0
    %v62 = vlog2.pop %v61
    %v63 = vmul.f32 %v62, 0.6931472
    %v64 = vmul.f32 -0.5, %v51
    %v65 = vadd.f32 %v64, 1.0
    %v66 = vmul.f32 %v65, %v51
    %v67 = vand.u32 2147483647, %v51
    %vm68 = vcmp.lt.f32.partialorder %v67, 0.0004427343
    %v69 = vsel %vm68, %v66, %v63
    %v70 = vmax.f32 %v40, 0.0
    %v71 = vmax.f32 %v41, 0.0
    %v72 = vadd.f32 %v70, %v60
    %v73 = vadd.f32 %v71, %v69
    %v74 = vsub.f32 0.0, %v40
    %v75 = vsub.f32 0.0, %v41
    %v76 = vmax.f32 %v74, 0.0
    %v77 = vmax.f32 %v75, 0.0
    %v78 = vadd.f32 %v76, %v60
    %v79 = vadd.f32 %v77, %v69
    %v80 = vmul.f32 %v42, %v78
    %v81 = vmul.f32 %v43, %v79
    %v82 = vsub.f32 1.0, %v42
    %v83 = vsub.f32 1.0, %v43
    %v84 = vmul.f32 %v82, %v72
    %v85 = vmul.f32 %v83, %v73
    %v86 = vadd.f32 %v80, %v84
    %v87 = vadd.f32 %v81, %v85
    %v88 = vadd.f32 %v86, %v87
    %89 = vst [vmem:[#allocation7] sm:$0xff] %v88
    // Predicated region
    $region18: #{tpu_custom_call.1} parent=1 // pred_check
      _
    $region19: #{tpu_custom_call.1} parent=1 // pred_check_branch
      %91 = sbr.rel (0) target = $region21
    $region20: #{tpu_custom_call.1} parent=1 // pred_region
      %s93 = ssub.s32 128, 128
      %94 = vsyncadd [#allocation4], %s93
      %s96 = sshll.u32 [#allocation7], 4
      %s97 = int_to_ptr.vmem [resolvable:$true] %s96
      %99 = dma.vmem_to_hbm [thread:$0]  %s97, 128, %s2, [#allocation4]
    $region21: #{tpu_custom_call.1} parent=1 // pred_fallthru
      _
    // Predicated region
    $region22: #{tpu_custom_call.1} parent=1 // pred_check
      _
    $region23: #{tpu_custom_call.1} parent=1 // pred_check_branch
      %101 = sbr.rel (0) target = $region25
    $region24: #{tpu_custom_call.1} parent=1 // pred_region
      %102 = dma.done [#allocation4], 128
    $region25: #{tpu_custom_call.1} parent=1 // pred_fallthru
      _
    %103 = vsyncpa [#allocation3], 1
    %104 = vsyncpa [#allocation6], 1
    %105 = vsyncpa [#allocation4], 1

</llo_original>
